<compile_context>
chip_gen: v7x
topology: tpu7x:2x2x1
jax: 0.10.0
libtpu: 0.0.40
codegen_flags: <defaults>
</compile_context>

<pallas_src>
import functools

import jax
import jax.numpy as jnp
from jax.experimental import pallas as pl
from jax.experimental.pallas import tpu as pltpu

# ------------------------------ static model config ------------------------------
CH = 8
CH_MULT = (1, 2)
IN_CHANNELS = 4
RESOLUTION = 8
TEMB_CH = CH * 4
NUM_GROUPS = 4
GN_EPS = 1e-6
BATCH = 2

# pltpu.roll lane-rotation convention, probed at runtime in __main__ BEFORE the kernels are
# traced.  True -> pltpu.roll matches jnp.roll (out[j] = x[(j - shift) % n]).
_ROLL_IS_JNP = True


# ------------------------------ in-kernel helpers (operate on values) ------------------------------
def _swish(x):
    return x * (1.0 / (1.0 + jnp.exp(-x)))


def _lane_shift(x, delta, n):
    """out[:, j] = x[:, (j + delta) % n] for a static python int `delta`."""
    d = delta % n
    if d == 0:
        return x
    shift = (n - d) if _ROLL_IS_JNP else d
    return pltpu.roll(x, shift, 1)


def _bcast_over_batch(v, n):
    """(C, B) f32 -> (C, n): column b broadcast over that batch's n//B lanes (no one-hot matmul)."""
    c, nb = v.shape
    s = n // nb
    lane_b = jax.lax.broadcasted_iota(jnp.int32, (1, n), 1) // s
    out = jnp.zeros((c, n), jnp.float32)
    for b in range(nb):
        out = jnp.where(lane_b == b, v[:, b:b + 1], out)
    return out


def _group_norm(x, gamma, beta, nbatch, groups, eps, swish):
    """GroupNorm on a (C, B*S) f32 tile, per-(batch, group) stats as nn.GroupNorm.

    One-pass stats (sum and sum-of-squares of the stacked [x; x*x]) via exact f32 masked lane
    reductions, tiny iota-built one-hots for group aggregation/expansion, and a single folded
    per-(channel,batch) scale/shift pair broadcast with lane-mask selects."""
    c, n = x.shape
    s = n // nbatch
    cg = c // groups
    inv_cnt = 1.0 / float(cg * s)
    lane_b = jax.lax.broadcasted_iota(jnp.int32, (1, n), 1) // s

    xs = jnp.concatenate([x, x * x], axis=0)                                  # (2C, N)
    cols = [jnp.sum(jnp.where(lane_b == b, xs, 0.0), axis=1, keepdims=True)
            for b in range(nbatch)]
    sums = jnp.concatenate(cols, axis=1)                                      # (2C, B)

    r_i = jax.lax.broadcasted_iota(jnp.int32, (2 * groups, 2 * c), 0)
    c_i = jax.lax.broadcasted_iota(jnp.int32, (2 * groups, 2 * c), 1)
    agg = (c_i // cg == r_i).astype(jnp.float32)                              # (2G, 2C)
    gsum = jnp.dot(agg, sums, preferred_element_type=jnp.float32)             # (2G, B)
    mean = gsum[:groups] * inv_cnt
    ex2 = gsum[groups:] * inv_cnt
    inv = jax.lax.rsqrt(jnp.maximum(ex2 - mean * mean, 0.0) + eps)            # (G, B)

    r_c = jax.lax.broadcasted_iota(jnp.int32, (2 * c, 2 * groups), 0)
    c_g = jax.lax.broadcasted_iota(jnp.int32, (2 * c, 2 * groups), 1)
    expand = (c_g == (r_c % c) // cg + groups * (r_c // c)).astype(jnp.float32)
    im = jnp.concatenate([inv, mean], axis=0)                                 # (2G, B)
    ic = jnp.dot(expand, im, preferred_element_type=jnp.float32)              # (2C, B)
    scale_c = gamma * ic[:c]
    shift_c = beta - ic[c:] * scale_c
    y = x * _bcast_over_batch(scale_c, n) + _bcast_over_batch(shift_c, n)
    if swish:
        y = _swish(y)
    return y


def _conv_taps_wh(x, dims, k, pad):
    """w- and h-direction shifted+masked conv taps of a (Cin, B*D*H*W) tile.

    Returns (k*k*Cin, N) f32 with rows ordered (kh, kw, cin), plus the per-lane d index."""
    _, n = x.shape
    d_sz, h_sz, w_sz = dims
    lane = jax.lax.broadcasted_iota(jnp.int32, (1, n), 1)
    sp = lane % (d_sz * h_sz * w_sz)
    d_i = sp // (h_sz * w_sz)
    h_i = (sp // w_sz) % h_sz
    w_i = sp % w_sz

    def shift_mask(v, delta, idx, off, lim):
        t = _lane_shift(v, delta, n)
        ok = (idx + off >= 0) & (idx + off < lim)
        return jnp.where(ok, t, 0.0)

    xw = jnp.concatenate(
        [shift_mask(x, kw - pad, w_i, kw - pad, w_sz) for kw in range(k)], axis=0)
    xhw = jnp.concatenate(
        [shift_mask(xw, (kh - pad) * w_sz, h_i, kh - pad, h_sz) for kh in range(k)], axis=0)
    return xhw, d_i


def _conv3d(x, wmat, bias, dims, k, pad):
    """Stride-1 3-D conv on a channel-first (Cin, B*D*H*W) tile with in-kernel im2col.

    wmat: (Cout, k^3*Cin) bf16, columns ordered (kd, kh, kw, cin)."""
    _, n = x.shape
    d_sz, h_sz, w_sz = dims
    xhw, d_i = _conv_taps_wh(x, dims, k, pad)
    taps = []
    for kd in range(k):
        dd = kd - pad
        t = _lane_shift(xhw, dd * h_sz * w_sz, n)
        ok = (d_i + dd >= 0) & (d_i + dd < d_sz)
        taps.append(jnp.where(ok, t, 0.0).astype(jnp.bfloat16))
    patches = jnp.concatenate(taps, axis=0)                                   # (k^3*Cin, N) bf16
    return jnp.dot(wmat, patches, preferred_element_type=jnp.float32) + bias


def _conv1x1(x, wmat, bias):
    return jnp.dot(wmat, x.astype(jnp.bfloat16), preferred_element_type=jnp.float32) + bias


def _downsample(x, wmat, bias, dims):
    """Conv3d(k=2, stride=2, pad=0): stride-1 "corner" conv at full resolution followed by a
    0/1 selection matmul that keeps the even-(d,h,w) lanes (lane-dense, no gathers)."""
    _, n = x.shape
    d_sz, h_sz, w_sz = dims
    y = _conv3d(x, wmat, bias, dims, k=2, pad=0)                              # (C, N)
    do, ho, wo = d_sz // 2, h_sz // 2, w_sz // 2
    n_out = (n // (d_sz * h_sz * w_sz)) * do * ho * wo
    rows = jax.lax.broadcasted_iota(jnp.int32, (n, n_out), 0)
    m = jax.lax.broadcasted_iota(jnp.int32, (n, n_out), 1)
    b_o = m // (do * ho * wo)
    r = m % (do * ho * wo)
    src = (b_o * (d_sz * h_sz * w_sz) + (2 * (r // (ho * wo))) * (h_sz * w_sz)
           + (2 * ((r // wo) % ho)) * w_sz + 2 * (r % wo))
    sel = (rows == src).astype(jnp.bfloat16)
    return jnp.dot(y.astype(jnp.bfloat16), sel, preferred_element_type=jnp.float32)


def _resnet(x, temb, prm, dims, nbatch):
    """ResnetBlock: GN+swish -> conv1 -> +temb_proj(swish(temb)) -> GN+swish -> conv2
    (+ nin 1x1 shortcut when Cin != Cout).  nn.Dropout is the identity at inference."""
    n1g, n1b, w1, b1, wt, bt, n2g, n2b, w2, b2 = prm[:10]
    n = x.shape[1]
    h = _group_norm(x, n1g, n1b, nbatch, NUM_GROUPS, GN_EPS, swish=True)
    h = _conv3d(h, w1, b1, dims, k=3, pad=1)
    tv = jnp.dot(wt, _swish(temb).astype(jnp.bfloat16),
                 preferred_element_type=jnp.float32) + bt                     # (Cout, B)
    h = h + _bcast_over_batch(tv, n)
    h = _group_norm(h, n2g, n2b, nbatch, NUM_GROUPS, GN_EPS, swish=True)
    h = _conv3d(h, w2, b2, dims, k=3, pad=1)
    if len(prm) == 12:
        x = _conv1x1(x, prm[10], prm[11])
    return x + h


def _attn(x, c2, prm, nbatch):
    """AttnBlock: stacked GN over [x; c2], q from c2, stacked k/v from x, one block-diagonal
    masked (N,N) softmax(QK^T)V over the full lane axis, proj, residual."""
    gcat, bcat, wq, bq, wkv, bkv, wp, bp = prm
    c, n = x.shape
    s = n // nbatch
    xc = jnp.concatenate([x, c2], axis=0)
    nrm = _group_norm(xc, gcat, bcat, nbatch, 2 * NUM_GROUPS, GN_EPS, swish=False)
    hn = nrm[:c]
    cn = nrm[c:]
    # 1/sqrt(C) attention scale is pre-folded into wq/bq.
    q = jnp.dot(wq, cn.astype(jnp.bfloat16), preferred_element_type=jnp.float32) + bq
    kv = jnp.dot(wkv, hn.astype(jnp.bfloat16), preferred_element_type=jnp.float32) + bkv
    key = kv[:c]
    val = kv[c:]
    scores = jax.lax.dot_general(q.astype(jnp.bfloat16), key.astype(jnp.bfloat16),
                                 (((0,), (0,)), ((), ())),
                                 preferred_element_type=jnp.float32)          # (Nq, Nk)
    row_b = jax.lax.broadcasted_iota(jnp.int32, (n, n), 0) // s
    col_b = jax.lax.broadcasted_iota(jnp.int32, (n, n), 1) // s
    scores = jnp.where(row_b == col_b, scores, -1e30)
    scores = scores - jnp.max(scores, axis=1, keepdims=True)
    p = jnp.exp(scores)
    p = p * pl.reciprocal(jnp.sum(p, axis=1, keepdims=True), approx=True)
    att = jax.lax.dot_general(val.astype(jnp.bfloat16), p.astype(jnp.bfloat16),
                              (((1,), (1,)), ((), ())),
                              preferred_element_type=jnp.float32)             # (C, Nq)
    h_ = jnp.dot(wp, att.astype(jnp.bfloat16), preferred_element_type=jnp.float32) + bp
    return x + h_


# ------------------------------ Pallas kernels (one grid step each) ------------------------------
def _make_stem_kernel(nbatch, dims):
    d_sz, h_sz, w_sz = dims
    n = nbatch * d_sz * h_sz * w_sz
    k, pad = 7, 3

    def kernel(xx_ref, w_ref, b_ref, wz_ref, bz_ref, cond_ref, h_ref):
        xx = xx_ref[...]                                  # (2*IN, N): x channels then xt channels
        xhw, d_i = _conv_taps_wh(xx, dims, k, pad)
        acc = None
        for kd in range(k):                               # kd-accumulation caps the VMEM footprint
            dd = kd - pad
            t = _lane_shift(xhw, dd * h_sz * w_sz, n)
            ok = (d_i + dd >= 0) & (d_i + dd < d_sz)
            tap = jnp.where(ok, t, 0.0).astype(jnp.bfloat16)
            part = jnp.dot(w_ref[kd], tap, preferred_element_type=jnp.float32)
            acc = part if acc is None else acc + part
        acc = acc + b_ref[...]                            # (2*CH, N)
        con = _swish(acc[:CH])                            # swish(conv_in_con(x))
        hin = _swish(acc[CH:])                            # swish(conv_in(xt))
        cond = _conv1x1(con, wz_ref[...], bz_ref[...])    # zero_con_in
        cond_ref[...] = cond
        h_ref[...] = hin + cond
    return kernel


def _make_level0_kernel(nbatch, dims):
    def kernel(*refs):
        # inputs: h, temb, resnet(10), zc0(2), down(2), zc1(2); outputs: cond1, h_down, cond2
        res = [r[...] for r in refs[2:12]]
        zc0w, zc0b, dnw, dnb, zc1w, zc1b = (r[...] for r in refs[12:18])
        cond1_ref, hd_ref, cond2_ref = refs[18], refs[19], refs[20]
        h = _resnet(refs[0][...], refs[1][...], res, dims, nbatch)
        cond1_ref[...] = _conv1x1(h, zc0w, zc0b)
        hd = _downsample(h, dnw, dnb, dims)
        hd_ref[...] = hd
        cond2_ref[...] = _conv1x1(hd, zc1w, zc1b)
    return kernel


def _make_level1_kernel(nbatch, dims):
    def kernel(*refs):
        # inputs: h, c2, temb, resnet+nin(12), attn(8), zc(2); outputs: h_out, cond3
        res = [r[...] for r in refs[3:15]]
        attn = [r[...] for r in refs[15:23]]
        zw, zb = refs[23][...], refs[24][...]
        hout_ref, cond_ref = refs[25], refs[26]
        h = _resnet(refs[0][...], refs[2][...], res, dims, nbatch)
        h = _attn(h, refs[1][...], attn, nbatch)
        hout_ref[...] = h
        cond_ref[...] = _conv1x1(h, zw, zb)
    return kernel


def _make_mid_kernel(nbatch, dims):
    def kernel(*refs):
        # inputs: h, c2, temb, resnet(10), attn(8), resnet(10), mbo(2); output: cond4
        res1 = [r[...] for r in refs[3:13]]
        attn = [r[...] for r in refs[13:21]]
        res2 = [r[...] for r in refs[21:31]]
        zw, zb = refs[31][...], refs[32][...]
        cond_ref = refs[33]
        c2 = refs[1][...]
        temb = refs[2][...]
        h = _resnet(refs[0][...], temb, res1, dims, nbatch)
        h = _attn(h, c2, attn, nbatch)
        h = _resnet(h, temb, res2, dims, nbatch)
        cond_ref[...] = _conv1x1(h, zw, zb)
    return kernel


# ------------------------------ ControlModel forward (4 launches) ------------------------------
def control_model_forward(kp, xt, x, c2, temb):
    nbatch = xt.shape[0]
    dims0 = tuple(xt.shape[2:])
    dims1 = tuple(d // 2 for d in dims0)
    n0 = nbatch * dims0[0] * dims0[1] * dims0[2]
    n1 = nbatch * dims1[0] * dims1[1] * dims1[2]
    c_top = CH
    c_mid = CH * CH_MULT[-1]

    def cfirst(a):                       # NCDHW -> (C, B*D*H*W), lane-dense spatial axis
        return jnp.transpose(a, (1, 0, 2, 3, 4)).reshape(a.shape[1], -1).astype(jnp.float32)

    xx = jnp.concatenate([cfirst(x), cfirst(xt)], axis=0)
    c2f = cfirst(c2)
    temb_t = jnp.transpose(temb).astype(jnp.float32)

    sd = lambda c, n: jax.ShapeDtypeStruct((c, n), jnp.float32)
    cparams = pltpu.CompilerParams(vmem_limit_bytes=64 * 1024 * 1024)

    # TODO(synk): every launch is a single grid step (one TensorCore); a 2-way lane split with
    #             conv halo handling (or pl.core_map) would be needed to use both v7x cores.
    cond0, h = pl.pallas_call(_make_stem_kernel(nbatch, dims0),
                              out_shape=(sd(c_top, n0), sd(c_top, n0)),
                              compiler_params=cparams)(xx, *kp["stem"])

    cond1, h, cond2 = pl.pallas_call(_make_level0_kernel(nbatch, dims0),
                                     out_shape=(sd(c_top, n0), sd(c_top, n1), sd(c_top, n1)),
                                     compiler_params=cparams)(h, temb_t, *kp["level0"])

    h, cond3 = pl.pallas_call(_make_level1_kernel(nbatch, dims1),
                              out_shape=(sd(c_mid, n1), sd(c_mid, n1)),
                              compiler_params=cparams)(h, c2f, temb_t, *kp["level1"])

    cond4 = pl.pallas_call(_make_mid_kernel(nbatch, dims1),
                           out_shape=sd(c_mid, n1),
                           compiler_params=cparams)(h, c2f, temb_t, *kp["mid"])

    def to_ncdhw(flat, d):
        return jnp.transpose(flat.reshape(flat.shape[0], nbatch, *d), (1, 0, 2, 3, 4))

    return [to_ncdhw(cond0, dims0), to_ncdhw(cond1, dims0), to_ncdhw(cond2, dims1),
            to_ncdhw(cond3, dims1), to_ncdhw(cond4, dims1)]


# ------------------------------ parameters: logical (reference) + packed (kernel) ------------------------------
def _bf16_rt(a):
    return a.astype(jnp.bfloat16).astype(jnp.float32)


def _col(v):
    return jnp.asarray(v, jnp.float32).reshape(-1, 1)


def _pack_conv3(w):
    """Conv3d weight (Cout, Cin, k, k, k) -> (Cout, k^3*Cin) bf16, columns (kd, kh, kw, cin)."""
    return jnp.transpose(w, (0, 2, 3, 4, 1)).reshape(w.shape[0], -1).astype(jnp.bfloat16)


def _pack_1x1(w):
    return jnp.asarray(w).astype(jnp.bfloat16)


def _pack_stem(w_con, w_in):
    """Both 7^3 stem convs in one (7, 2*CH, 7*7*2*IN) bf16 weight (per-kd blocks for the
    kd-accumulated matmul): rows [0,CH) produce conv_in_con(x), rows [CH,2CH) conv_in(xt)."""
    k = 7
    wc = jnp.transpose(w_con, (2, 0, 3, 4, 1))     # (kd, Cout, kh, kw, Cin)
    wi = jnp.transpose(w_in, (2, 0, 3, 4, 1))
    zero = jnp.zeros_like(wc)
    top = jnp.concatenate([wc, zero], axis=4)      # x-channel columns | xt-channel columns
    bot = jnp.concatenate([zero, wi], axis=4)
    w = jnp.concatenate([top, bot], axis=1)        # (kd, 2*CH, kh, kw, 2*IN)
    return w.reshape(k, 2 * CH, k * k * 2 * IN_CHANNELS).astype(jnp.bfloat16)


def _pack_resnet(p):
    out = [_col(p["n1_g"]), _col(p["n1_b"]),
           _pack_conv3(p["conv1_w"]), _col(p["conv1_b"]),
           _pack_1x1(p["temb_w"]), _col(p["temb_b"]),
           _col(p["n2_g"]), _col(p["n2_b"]),
           _pack_conv3(p["conv2_w"]), _col(p["conv2_b"])]
    if "nin_w" in p:
        out += [_pack_1x1(p["nin_w"]), _col(p["nin_b"])]
    return tuple(out)


def _pack_attn(p, c):
    s = float(c) ** -0.5                           # attention scale folded into q weights
    return (jnp.concatenate([_col(p["n1_g"]), _col(p["n2_g"])], axis=0),
            jnp.concatenate([_col(p["n1_b"]), _col(p["n2_b"])], axis=0),
            _pack_1x1(p["q_w"] * s), _col(p["q_b"]) * s,
            jnp.concatenate([_pack_1x1(p["k_w"]), _pack_1x1(p["v_w"])], axis=0),
            jnp.concatenate([_col(p["k_b"]), _col(p["v_b"])], axis=0),
            _pack_1x1(p["proj_w"]), _col(p["proj_b"]))


def init_logical_params(key):
    """Logical (PyTorch-layout) parameters, pre-rounded through bf16 so the reference and the
    bf16-fed kernels share identical weight values."""
    ks = iter(jax.random.split(key, 128))

    def w(shape, s=0.05):
        return _bf16_rt(s * jax.random.normal(next(ks), shape, jnp.float32))

    def gn(c):
        return (_bf16_rt(1.0 + 0.1 * jax.random.normal(next(ks), (c,), jnp.float32)),
                _bf16_rt(0.05 * jax.random.normal(next(ks), (c,), jnp.float32)))

    def resnet(ci, co):
        p = {}
        p["n1_g"], p["n1_b"] = gn(ci)
        p["conv1_w"] = w((co, ci, 3, 3, 3)); p["conv1_b"] = w((co,))
        p["temb_w"] = w((co, TEMB_CH));      p["temb_b"] = w((co,))
        p["n2_g"], p["n2_b"] = gn(co)
        p["conv2_w"] = w((co, co, 3, 3, 3)); p["conv2_b"] = w((co,))
        if ci != co:
            p["nin_w"] = w((co, ci)); p["nin_b"] = w((co,))
        return p

    def attn(c):
        p = {}
        p["n1_g"], p["n1_b"] = gn(c)
        p["n2_g"], p["n2_b"] = gn(c)
        for nm in ("q", "k", "v", "proj"):
            p[nm + "_w"] = w((c, c)); p[nm + "_b"] = w((c,))
        return p

    c1 = CH * CH_MULT[-1]
    lp = {}
    lp["conv_in_con_w"] = w((CH, IN_CHANNELS, 7, 7, 7)); lp["conv_in_con_b"] = w((CH,))
    lp["conv_in_w"] = w((CH, IN_CHANNELS, 7, 7, 7));     lp["conv_in_b"] = w((CH,))
    # NOTE: the PyTorch module zero-inits every zero-conv (zero_module); small nonzero values
    # are used here so the reference comparison exercises the numerics (per the review).
    lp["zin_w"] = w((CH, CH)); lp["zin_b"] = w((CH,))
    lp["res0"] = resnet(CH, CH)
    lp["zc0_w"] = w((CH, CH)); lp["zc0_b"] = w((CH,))
    lp["down_w"] = w((CH, CH, 2, 2, 2)); lp["down_b"] = w((CH,))
    lp["zc1_w"] = w((CH, CH)); lp["zc1_b"] = w((CH,))
    lp["res1"] = resnet(CH, c1)
    lp["attn1"] = attn(c1)
    lp["zc2_w"] = w((c1, c1)); lp["zc2_b"] = w((c1,))
    lp["mid_res1"] = resnet(c1, c1)
    lp["mid_attn"] = attn(c1)
    lp["mid_res2"] = resnet(c1, c1)
    lp["mbo_w"] = w((c1, c1)); lp["mbo_b"] = w((c1,))
    # TODO(synk): parameters the reference forward never touches (condition_time, temb.dense,
    #             temb_proj, condation_proj, logvar) are not instantiated.
    return lp


def pack_params(lp):
    c1 = CH * CH_MULT[-1]
    kp = {}
    kp["stem"] = (_pack_stem(lp["conv_in_con_w"], lp["conv_in_w"]),
                  jnp.concatenate([_col(lp["conv_in_con_b"]), _col(lp["conv_in_b"])], axis=0),
                  _pack_1x1(lp["zin_w"]), _col(lp["zin_b"]))
    kp["level0"] = (_pack_resnet(lp["res0"])
                    + (_pack_1x1(lp["zc0_w"]), _col(lp["zc0_b"]),
                       _pack_conv3(lp["down_w"]), _col(lp["down_b"]),
                       _pack_1x1(lp["zc1_w"]), _col(lp["zc1_b"])))
    kp["level1"] = (_pack_resnet(lp["res1"]) + _pack_attn(lp["attn1"], c1)
                    + (_pack_1x1(lp["zc2_w"]), _col(lp["zc2_b"])))
    kp["mid"] = (_pack_resnet(lp["mid_res1"]) + _pack_attn(lp["mid_attn"], c1)
                 + _pack_resnet(lp["mid_res2"])
                 + (_pack_1x1(lp["mbo_w"]), _col(lp["mbo_b"])))
    return kp


# ------------------------------ pure-JAX reference (mirrors the PyTorch module) ------------------------------
def _ref_swish(x):
    return x * jax.nn.sigmoid(x)


def _ref_groupnorm(x, g, b):
    bsz, c = x.shape[:2]
    xg = x.reshape(bsz, NUM_GROUPS, -1)
    m = jnp.mean(xg, axis=2, keepdims=True)
    v = jnp.mean((xg - m) ** 2, axis=2, keepdims=True)
    xn = ((xg - m) / jnp.sqrt(v + GN_EPS)).reshape(x.shape)
    return xn * g.reshape(1, c, 1, 1, 1) + b.reshape(1, c, 1, 1, 1)


def _ref_conv3d(x, w, b, stride, pad):
    out = jax.lax.conv_general_dilated(x, w, (stride,) * 3, [(pad, pad)] * 3,
                                       dimension_numbers=("NCDHW", "OIDHW", "NCDHW"))
    return out + b.reshape(1, -1, 1, 1, 1)


def _ref_conv1x1(x, w, b):
    return jnp.einsum("oc,bcdhw->bodhw", w, x) + b.reshape(1, -1, 1, 1, 1)


def _ref_resnet(x, temb, p):
    h = _ref_swish(_ref_groupnorm(x, p["n1_g"], p["n1_b"]))
    h = _ref_conv3d(h, p["conv1_w"], p["conv1_b"], 1, 1)
    h = h + (_ref_swish(temb) @ p["temb_w"].T + p["temb_b"])[:, :, None, None, None]
    h = _ref_swish(_ref_groupnorm(h, p["n2_g"], p["n2_b"]))
    h = _ref_conv3d(h, p["conv2_w"], p["conv2_b"], 1, 1)
    if "nin_w" in p:
        x = _ref_conv1x1(x, p["nin_w"], p["nin_b"])
    return x + h


def _ref_attn(x, c2, p):
    bsz, c = x.shape[:2]
    spatial = x.shape[2] * x.shape[3] * x.shape[4]
    hn = _ref_groupnorm(x, p["n1_g"], p["n1_b"])
    cn = _ref_groupnorm(c2, p["n2_g"], p["n2_b"])
    q = _ref_conv1x1(cn, p["q_w"], p["q_b"]).reshape(bsz, c, spatial)
    k = _ref_conv1x1(hn, p["k_w"], p["k_b"]).reshape(bsz, c, spatial)
    v = _ref_conv1x1(hn, p["v_w"], p["v_b"]).reshape(bsz, c, spatial)
    w_ = jnp.einsum("bci,bcj->bij", q, k) * (float(c) ** -0.5)
    w_ = jax.nn.softmax(w_, axis=2)
    h_ = jnp.einsum("bcj,bij->bci", v, w_).reshape(x.shape)
    h_ = _ref_conv1x1(h_, p["proj_w"], p["proj_b"])
    return x + h_


def reference_forward(lp, xt, x, c2, temb):
    cond = []
    h0 = _ref_conv1x1(_ref_swish(_ref_conv3d(x, lp["conv_in_con_w"], lp["conv_in_con_b"], 1, 3)),
                      lp["zin_w"], lp["zin_b"])
    cond.append(h0)
    h = _ref_swish(_ref_conv3d(xt, lp["conv_in_w"], lp["conv_in_b"], 1, 3)) + h0
    h = _ref_resnet(h, temb, lp["res0"])
    cond.append(_ref_conv1x1(h, lp["zc0_w"], lp["zc0_b"]))
    h = _ref_conv3d(h, lp["down_w"], lp["down_b"], 2, 0)
    cond.append(_ref_conv1x1(h, lp["zc1_w"], lp["zc1_b"]))
    h = _ref_resnet(h, temb, lp["res1"])
    h = _ref_attn(h, c2, lp["attn1"])
    cond.append(_ref_conv1x1(h, lp["zc2_w"], lp["zc2_b"]))
    h = _ref_resnet(h, temb, lp["mid_res1"])
    h = _ref_attn(h, c2, lp["mid_attn"])
    h = _ref_resnet(h, temb, lp["mid_res2"])
    cond.append(_ref_conv1x1(h, lp["mbo_w"], lp["mbo_b"]))
    return cond


# ------------------------------ pltpu.roll convention probe ------------------------------
def _detect_roll_convention():
    def kern(x_ref, o_ref):
        o_ref[...] = pltpu.roll(x_ref[...], 1, 1)
    x = jnp.tile(jnp.arange(128, dtype=jnp.float32)[None, :], (8, 1))
    out = pl.pallas_call(kern, out_shape=jax.ShapeDtypeStruct((8, 128), jnp.float32))(x)
    if bool(jnp.array_equal(out, jnp.roll(x, 1, axis=1))):
        return True
    if bool(jnp.array_equal(out, jnp.roll(x, -1, axis=1))):
        return False
    raise RuntimeError("unexpected pltpu.roll lane-rotation convention")


# ------------------------------ main ------------------------------
if __name__ == "__main__":
    _ROLL_IS_JNP = _detect_roll_convention()

    root = jax.random.PRNGKey(0)
    kprm, k1, k2, k3, k4 = jax.random.split(root, 5)
    lp = init_logical_params(kprm)
    kp = pack_params(lp)

    mid_ch = CH * CH_MULT[-1]
    mid_res = RESOLUTION // 2
    xt = jax.random.normal(k1, (BATCH, IN_CHANNELS, RESOLUTION, RESOLUTION, RESOLUTION), jnp.float32)
    x = jax.random.normal(k2, (BATCH, IN_CHANNELS, RESOLUTION, RESOLUTION, RESOLUTION), jnp.float32)
    c2 = jax.random.normal(k3, (BATCH, mid_ch, mid_res, mid_res, mid_res), jnp.float32)
    temb = jax.random.normal(k4, (BATCH, TEMB_CH), jnp.float32)

    run = jax.jit(functools.partial(control_model_forward, kp))
    cond = jax.block_until_ready(run(xt, x, c2, temb))

    ref = jax.jit(functools.partial(reference_forward, lp))(xt, x, c2, temb)

    expected_shapes = [
        (BATCH, CH, RESOLUTION, RESOLUTION, RESOLUTION),   # zero_con_in output
        (BATCH, CH, RESOLUTION, RESOLUTION, RESOLUTION),   # level 0 block zero conv
        (BATCH, CH, mid_res, mid_res, mid_res),            # level 0 downsample zero conv
        (BATCH, mid_ch, mid_res, mid_res, mid_res),        # level 1 block zero conv (post attn)
        (BATCH, mid_ch, mid_res, mid_res, mid_res),        # middle_block_out
    ]
    assert len(cond) == len(expected_shapes)
    for out, r, shp in zip(cond, ref, expected_shapes):
        assert out.shape == shp, (out.shape, shp)
        assert bool(jnp.all(jnp.isfinite(out)))
        err = float(jnp.max(jnp.abs(out - r)))
        scale = float(jnp.max(jnp.abs(r)))
        # bf16 MXU operands / approx-reciprocal softmax are deliberate precision trades.
        assert err <= 0.10 * scale + 1e-3, (err, scale)
    print("KERNEL_OK")
</pallas_src>

<mosaic_0001>
module attributes {stable_mosaic.version = 11 : i64} {
  func.func @kern(%arg0: memref<8x128xf32, #tpu.memory_space<vmem>>, %arg1: memref<8x128xf32, #tpu.memory_space<vmem>>) attributes {dimension_semantics = [], scalar_prefetch = 0 : i64, scratch_operands = 0 : i64, tpu.core_type = #tpu.core_type<tc>} {
    %c0 = arith.constant 0 : index
    %c0_0 = arith.constant 0 : index
    %0 = vector.load %arg0[%c0, %c0_0] : memref<8x128xf32, #tpu.memory_space<vmem>>, vector<8x128xf32>
    %c1_i32 = arith.constant 1 : i32
    %1 = tpu.dynamic_rotate %0 by %c1_i32 dim 1 : vector<8x128xf32>, i32 -> vector<8x128xf32>
    %c0_1 = arith.constant 0 : index
    %c0_2 = arith.constant 0 : index
    %2 = vector.load %arg1[%c0_1, %c0_2] : memref<8x128xf32, #tpu.memory_space<vmem>>, vector<8x128xf32>
    tpu.vector_store %arg1[%c0_1, %c0_2], %1 {strides = array<i32>} : memref<8x128xf32, #tpu.memory_space<vmem>>, vector<8x128xf32>,
    return
  }
}

</mosaic_0001>

<llo_original>
// kernel: tpu_custom_call.1
$region0: #{tpu_custom_call.1}
  #allocation0 [shape = 'u32[]', space=smem, size = 0x4, offset = 0x4, fixed_abs, tag = 'smem constant byte address 0x4 - core index']
  #allocation1 [shape = 'u32[144,128]{1,0:T(1,128)}', space=vmem, size = 0x12000, scoped, tag = 'internal scratch']
  %s0 = inlined_call_operand.hbm [shape: f32[8,128], index: 0, kind: input, shape index: {}]
  %s1 = inlined_call_operand.hbm [shape: f32[8,128], index: 1, kind: output, shape index: {}]
  %s2 = sld [smem:[#allocation0]]
  $region18: #{tpu_custom_call.1} parent=0
    _
  %s4 = ssub.s32 1, %s2
  %s5 = scalar_select 0, %s4, %s2
  $region1: #{tpu_custom_call.1} parent=0
    #allocation2 [shape = 'u8[4096]{0}', space=vmem, size = 0x1000, scoped, tag = 'input window, operand 0, single buffered']
    #allocation3 [shape = 's32[1]{0}', space=sflag, size = 0x4, scoped, tag = 'scoped memory for tpu_custom_call.1']
    #allocation4 [shape = 's32[1]{0}', space=sflag, size = 0x4, scoped, tag = 'scoped memory for tpu_custom_call.1']
    #allocation5 [shape = 'u8[4096]{0}', space=vmem, size = 0x1000, scoped, tag = 'output window, operand 0, single buffered']
    %6 = vsyncpa [#allocation3], 0
    %7 = vsyncpa [#allocation4], 0
    // Predicated region
    $region2: #{tpu_custom_call.1} parent=1 // pred_check
      _
    $region3: #{tpu_custom_call.1} parent=1 // pred_check_branch
      %9 = sbr.rel (0) target = $region5
    $region4: #{tpu_custom_call.1} parent=1 // pred_region
      %s11 = ssub.s32 128, 128
      %12 = vsyncadd [#allocation3], %s11
      %s14 = sshll.u32 [#allocation2], 4
      %s15 = int_to_ptr.vmem [resolvable:$true] %s14
      %17 = dma.hbm_to_vmem [thread:$0]  %s0, 128, %s15, [#allocation3]
    $region5: #{tpu_custom_call.1} parent=1 // pred_fallthru
      _
    // Predicated region
    $region6: #{tpu_custom_call.1} parent=1 // pred_check
      _
    $region7: #{tpu_custom_call.1} parent=1 // pred_check_branch
      %19 = sbr.rel (0) target = $region9
    $region8: #{tpu_custom_call.1} parent=1 // pred_region
      %20 = dma.done [#allocation3], 128
    $region9: #{tpu_custom_call.1} parent=1 // pred_fallthru
      _
    %v21 = vld [vmem:[#allocation2] sm:$0xff]
    %22 = vrot.lane.b32.xlu0 %v21, 1
    %v23 = vpop.permute.xlu0 %22
    %24 = vst [vmem:[#allocation5] sm:$0xff] %v23
    // Predicated region
    $region10: #{tpu_custom_call.1} parent=1 // pred_check
      _
    $region11: #{tpu_custom_call.1} parent=1 // pred_check_branch
      %26 = sbr.rel (0) target = $region13
    $region12: #{tpu_custom_call.1} parent=1 // pred_region
      %s28 = ssub.s32 128, 128
      %29 = vsyncadd [#allocation4], %s28
      %s31 = sshll.u32 [#allocation5], 4
      %s32 = int_to_ptr.vmem [resolvable:$true] %s31
      %34 = dma.vmem_to_hbm [thread:$0]  %s32, 128, %s1, [#allocation4]
    $region13: #{tpu_custom_call.1} parent=1 // pred_fallthru
      _
    // Predicated region
    $region14: #{tpu_custom_call.1} parent=1 // pred_check
      _
    $region15: #{tpu_custom_call.1} parent=1 // pred_check_branch
      %36 = sbr.rel (0) target = $region17
    $region16: #{tpu_custom_call.1} parent=1 // pred_region
      %37 = dma.done [#allocation4], 128
    $region17: #{tpu_custom_call.1} parent=1 // pred_fallthru
      _
    %38 = vsyncpa [#allocation3], 1
    %39 = vsyncpa [#allocation4], 1

</llo_original>
